<compile_context>
chip_gen: v7x
topology: tpu7x:2x2x1
jax: 0.10.0
libtpu: 0.0.40
codegen_flags: <defaults>
</compile_context>

<pallas_src>
import functools

import numpy as np
import jax
import jax.numpy as jnp
from jax.experimental import pallas as pl
from jax.experimental.pallas import tpu as pltpu

_LANES = 128
_SUBLANES = 8
_LOGIT_PAD = -1.0e4  # exp(-1e4) == 0 in f32 -> padded elements contribute 0


def _balanced_bce_kernel(logits_ref, label_ref, res_ref, acc_lv, acc_plv,
                         *maybe_acc_lab, rows, block_rows, mask_from,
                         needs_mask):
    # logits_ref / label_ref : [block_rows, 128] VMEM tiles
    # res_ref                : [1, 3] SMEM per-core partial sums
    # acc_lv / acc_plv / acc_lab : [block_rows, 128] f32 VMEM accumulators
    acc_lab = maybe_acc_lab[0] if maybe_acc_lab else None

    c = pl.program_id(0)
    i = pl.program_id(1)
    inner = pl.num_programs(1)
    t = c * inner + i  # logical global tile index

    @pl.when(i == 0)
    def _init():
        if acc_lab is not None:
            acc_lab[...] = jnp.zeros_like(acc_lab)
        acc_lv[...] = jnp.zeros_like(acc_lv)
        acc_plv[...] = jnp.zeros_like(acc_plv)

    x = logits_ref[...].astype(jnp.float32)
    y = label_ref[...].astype(jnp.float32)

    def accumulate(row_valid):
        labels = (y >= 0.5).astype(jnp.float32)
        gt0 = (x >= 0.0).astype(jnp.float32)
        # -|x| is exactly the reference's (output - 2*output*gt0).
        loss_val = x * (labels - gt0) - jnp.log(1.0 + jnp.exp(-jnp.abs(x)))
        if row_valid is not None:
            # where (not multiply): a garbage/NaN tail cannot poison the sums.
            labels = jnp.where(row_valid, labels, 0.0)
            loss_val = jnp.where(row_valid, loss_val, 0.0)
        if acc_lab is not None:
            acc_lab[...] += labels
        acc_lv[...] += loss_val
        acc_plv[...] += labels * loss_val

    if needs_mask:
        @pl.when(t < mask_from)
        def _fast():
            accumulate(None)

        @pl.when(t >= mask_from)
        def _masked():
            row = jax.lax.broadcasted_iota(jnp.int32, x.shape, 0)
            row_valid = (t * block_rows + row) < rows
            accumulate(row_valid)
    else:
        accumulate(None)

    @pl.when(i == inner - 1)
    def _finalize():
        if acc_lab is not None:
            res_ref[0, 0] = jnp.sum(acc_lab[...])
        else:
            res_ref[0, 0] = jnp.float32(0.0)
        res_ref[0, 1] = jnp.sum(acc_lv[...])
        res_ref[0, 2] = jnp.sum(acc_plv[...])


def balanced_cross_entropy_loss(output, label, *, size_average=True,
                                batch_average=True, pos_weight=None,
                                block_rows=2048):
    """output, label: same shape (any rank). Returns scalar f32 loss."""
    # TODO(synk): optional void_pixels path of the PyTorch forward is not
    # implemented (default forward call uses void_pixels=None).
    assert output.shape == label.shape
    shape = output.shape
    total = int(np.prod(shape))

    logits_flat = jnp.ravel(output)   # free reshape, native dtype kept
    label_flat = jnp.ravel(label)

    chunk = _SUBLANES * _LANES  # 1024
    padded_total = -(-total // chunk) * chunk
    if padded_total != total:
        # Rare path (image tensors are usually multiples of 1024). Padded
        # logits = -1e4 / labels = 0 contribute exactly 0 to every sum.
        pad = padded_total - total
        logits_flat = jnp.pad(logits_flat, (0, pad), constant_values=_LOGIT_PAD)
        label_flat = jnp.pad(label_flat, (0, pad), constant_values=0)

    rows = padded_total // _LANES                 # multiple of 8
    logits2 = logits_flat.reshape(rows, _LANES)
    label2 = label_flat.reshape(rows, _LANES)

    br = min(int(block_rows), rows)
    br = max(_SUBLANES, (br // _SUBLANES) * _SUBLANES)
    n_tiles = -(-rows // br)
    ncores = 2 if n_tiles >= 2 else 1             # both v7x TensorCores
    inner = -(-n_tiles // ncores)

    # Tiles >= mask_from may see rows past the array (partial edge block or the
    # phantom tile of the core split) and must mask by global row index.
    mask_from = rows // br if rows % br != 0 else n_tiles
    needs_mask = mask_from < ncores * inner

    need_lab = pos_weight is None
    scratch = [pltpu.VMEM((br, _LANES), jnp.float32),
               pltpu.VMEM((br, _LANES), jnp.float32)]
    if need_lab:
        scratch.append(pltpu.VMEM((br, _LANES), jnp.float32))

    kernel = functools.partial(
        _balanced_bce_kernel,
        rows=rows, block_rows=br, mask_from=mask_from, needs_mask=needs_mask)

    def in_map(c, i):
        # Clamp so the phantom tile (core split, odd n_tiles) re-reads a valid
        # block; its contribution is fully masked inside the kernel.
        return (jnp.minimum(c * inner + i, n_tiles - 1), 0)

    partials = pl.pallas_call(
        kernel,
        out_shape=jax.ShapeDtypeStruct((ncores, 3), jnp.float32),
        grid=(ncores, inner),
        in_specs=[
            pl.BlockSpec((br, _LANES), in_map),
            pl.BlockSpec((br, _LANES), in_map),
        ],
        out_specs=pl.BlockSpec((1, 3), lambda c, i: (c, 0),
                               memory_space=pltpu.MemorySpace.SMEM),
        scratch_shapes=scratch,
        compiler_params=pltpu.CompilerParams(
            dimension_semantics=("parallel", "arbitrary"),
            vmem_limit_bytes=32 * 1024 * 1024,
        ),
    )(logits2, label2)

    # Tiny scalar epilogue: balanced combine + normalization in plain JAX.
    s_lv = jnp.sum(partials[:, 1])    # sum(loss_val)
    s_plv = jnp.sum(partials[:, 2])   # sum(labels * loss_val)
    loss_pos = -s_plv
    loss_neg = -(s_lv - s_plv)
    if pos_weight is None:
        s_lab = jnp.sum(partials[:, 0])
        w = (float(total) - s_lab) / float(total)
    else:
        w = jnp.float32(pos_weight)
    final = w * loss_pos + (1.0 - w) * loss_neg
    if size_average:
        final = final / float(total)
    elif batch_average:
        final = final / float(shape[0])
    return final


def _balanced_bce_ref(output, label, size_average=True, batch_average=True,
                      pos_weight=None):
    # Pure-JAX reference mirroring the PyTorch forward exactly.
    x = output.astype(jnp.float32)
    y = label.astype(jnp.float32)
    labels = (y >= 0.5).astype(jnp.float32)
    if pos_weight is None:
        num_pos = jnp.sum(labels)
        num_neg = jnp.sum(1.0 - labels)
        num_total = num_pos + num_neg
        w = num_neg / num_total
    else:
        w = pos_weight
    gt0 = (x >= 0.0).astype(jnp.float32)
    loss_val = x * (labels - gt0) - jnp.log(1.0 + jnp.exp(x - 2.0 * x * gt0))
    loss_pos = jnp.sum(-labels * loss_val)
    loss_neg = jnp.sum(-(1.0 - labels) * loss_val)
    final = w * loss_pos + (1.0 - w) * loss_neg
    if size_average:
        final = final / float(np.prod(y.shape))
    elif batch_average:
        final = final / y.shape[0]
    return final


if __name__ == "__main__":
    key = jax.random.PRNGKey(0)
    k1, k2, k3, k4, k5, k6 = jax.random.split(key, 6)

    # 1) Small input (pads 512 -> 1024 via the -1e4 logit-pad path).
    output = jax.random.normal(k1, (2, 1, 16, 16), dtype=jnp.float32) * 3.0
    label = jax.random.bernoulli(k2, 0.4, (2, 1, 16, 16)).astype(jnp.float32)
    loss = jax.block_until_ready(balanced_cross_entropy_loss(output, label))
    ref = jax.block_until_ready(_balanced_bce_ref(output, label))
    np.testing.assert_allclose(np.asarray(loss), np.asarray(ref),
                               rtol=1e-5, atol=1e-6)

    # 2) Multi-tile, two-core split with an odd tile count (phantom tile masked).
    output2 = jax.random.normal(k3, (2, 1, 64, 80), dtype=jnp.float32)
    label2 = jax.random.bernoulli(k4, 0.3, (2, 1, 64, 80)).astype(jnp.float32)
    loss2 = jax.block_until_ready(
        balanced_cross_entropy_loss(output2, label2, block_rows=16))
    ref2 = jax.block_until_ready(_balanced_bce_ref(output2, label2))
    np.testing.assert_allclose(np.asarray(loss2), np.asarray(ref2),
                               rtol=1e-5, atol=1e-6)

    # 3) Partial last block (rows % block_rows != 0) exercises the where-mask.
    loss3 = jax.block_until_ready(
        balanced_cross_entropy_loss(output2, label2, block_rows=24))
    np.testing.assert_allclose(np.asarray(loss3), np.asarray(ref2),
                               rtol=1e-5, atol=1e-6)

    # 4) Static pos_weight path (label-count accumulator compiled out).
    output4 = jax.random.normal(k5, (2, 1, 32, 64), dtype=jnp.float32)
    label4 = jax.random.bernoulli(k6, 0.5, (2, 1, 32, 64)).astype(jnp.float32)
    loss4 = jax.block_until_ready(
        balanced_cross_entropy_loss(output4, label4, pos_weight=0.8,
                                    block_rows=16))
    ref4 = jax.block_until_ready(
        _balanced_bce_ref(output4, label4, pos_weight=0.8))
    np.testing.assert_allclose(np.asarray(loss4), np.asarray(ref4),
                               rtol=1e-5, atol=1e-6)

    print("KERNEL_OK")
</pallas_src>

<mosaic_0001>
module attributes {stable_mosaic.version = 11 : i64} {
  func.func @_balanced_bce_kernel(%arg0: i32, %arg1: i32, %arg2: memref<8x128xf32, #tpu.memory_space<vmem>>, %arg3: memref<8x128xf32, #tpu.memory_space<vmem>>, %arg4: memref<1x3xf32, #tpu.memory_space<smem>>, %arg5: memref<8x128xf32, #tpu.memory_space<vmem>>, %arg6: memref<8x128xf32, #tpu.memory_space<vmem>>, %arg7: memref<8x128xf32, #tpu.memory_space<vmem>>) attributes {dimension_semantics = [#tpu.dimension_semantics<parallel>, #tpu.dimension_semantics<arbitrary>], iteration_bounds = array<i64: 1, 1>, scalar_prefetch = 0 : i64, scratch_operands = 3 : i64, tpu.core_type = #tpu.core_type<tc>, window_params = [{transform_indices = @transform_0, window_bounds = array<i64: 8, 128>}, {transform_indices = @transform_1, window_bounds = array<i64: 8, 128>}, {transform_indices = @transform_2, window_bounds = array<i64: 1, 3>}]} {
    %c0_i32 = arith.constant 0 : i32
    %0 = arith.cmpi eq, %arg1, %c0_i32 : i32
    %1 = arith.extui %0 : i1 to i32
    %c0_i32_0 = arith.constant 0 : i32
    %2 = arith.cmpi ne, %1, %c0_i32_0 : i32
    scf.if %2 {
      %cst_21 = arith.constant 0.000000e+00 : f32
      %36 = vector.broadcast %cst_21 : f32 to vector<8x128xf32>
      %c0_22 = arith.constant 0 : index
      %c0_23 = arith.constant 0 : index
      %37 = vector.load %arg7[%c0_22, %c0_23] : memref<8x128xf32, #tpu.memory_space<vmem>>, vector<8x128xf32>
      tpu.vector_store %arg7[%c0_22, %c0_23], %36 {strides = array<i32>} : memref<8x128xf32, #tpu.memory_space<vmem>>, vector<8x128xf32>,
      %cst_24 = arith.constant 0.000000e+00 : f32
      %38 = vector.broadcast %cst_24 : f32 to vector<8x128xf32>
      %c0_25 = arith.constant 0 : index
      %c0_26 = arith.constant 0 : index
      %39 = vector.load %arg5[%c0_25, %c0_26] : memref<8x128xf32, #tpu.memory_space<vmem>>, vector<8x128xf32>
      tpu.vector_store %arg5[%c0_25, %c0_26], %38 {strides = array<i32>} : memref<8x128xf32, #tpu.memory_space<vmem>>, vector<8x128xf32>,
      %cst_27 = arith.constant 0.000000e+00 : f32
      %40 = vector.broadcast %cst_27 : f32 to vector<8x128xf32>
      %c0_28 = arith.constant 0 : index
      %c0_29 = arith.constant 0 : index
      %41 = vector.load %arg6[%c0_28, %c0_29] : memref<8x128xf32, #tpu.memory_space<vmem>>, vector<8x128xf32>
      tpu.vector_store %arg6[%c0_28, %c0_29], %40 {strides = array<i32>} : memref<8x128xf32, #tpu.memory_space<vmem>>, vector<8x128xf32>,
    } else {
    }
    %c0 = arith.constant 0 : index
    %c0_1 = arith.constant 0 : index
    %3 = vector.load %arg2[%c0, %c0_1] : memref<8x128xf32, #tpu.memory_space<vmem>>, vector<8x128xf32>
    %c0_2 = arith.constant 0 : index
    %c0_3 = arith.constant 0 : index
    %4 = vector.load %arg3[%c0_2, %c0_3] : memref<8x128xf32, #tpu.memory_space<vmem>>, vector<8x128xf32>
    %cst = arith.constant 5.000000e-01 : f32
    %5 = vector.broadcast %cst : f32 to vector<8x128xf32>
    %6 = arith.cmpf oge, %4, %5 : vector<8x128xf32>
    %7 = arith.extui %6 : vector<8x128xi1> to vector<8x128xi32>
    %8 = arith.sitofp %7 : vector<8x128xi32> to vector<8x128xf32>
    %cst_4 = arith.constant 0.000000e+00 : f32
    %9 = vector.broadcast %cst_4 : f32 to vector<8x128xf32>
    %10 = arith.cmpf oge, %3, %9 : vector<8x128xf32>
    %11 = arith.extui %10 : vector<8x128xi1> to vector<8x128xi32>
    %12 = arith.sitofp %11 : vector<8x128xi32> to vector<8x128xf32>
    %13 = arith.subf %8, %12 : vector<8x128xf32>
    %14 = arith.mulf %3, %13 : vector<8x128xf32>
    %15 = math.absf %3 : vector<8x128xf32>
    %cst_5 = arith.constant 0.000000e+00 : f32
    %16 = vector.broadcast %cst_5 : f32 to vector<8x128xf32>
    %17 = arith.subf %16, %15 : vector<8x128xf32>
    %18 = math.exp %17 : vector<8x128xf32>
    %cst_6 = arith.constant 1.000000e+00 : f32
    %19 = vector.broadcast %cst_6 : f32 to vector<8x128xf32>
    %20 = arith.addf %19, %18 : vector<8x128xf32>
    %21 = math.log %20 : vector<8x128xf32>
    %22 = arith.subf %14, %21 : vector<8x128xf32>
    %c0_7 = arith.constant 0 : index
    %c0_8 = arith.constant 0 : index
    %23 = vector.load %arg7[%c0_7, %c0_8] : memref<8x128xf32, #tpu.memory_space<vmem>>, vector<8x128xf32>
    %24 = arith.addf %23, %8 : vector<8x128xf32>
    %c0_9 = arith.constant 0 : index
    %c0_10 = arith.constant 0 : index
    %25 = vector.load %arg7[%c0_9, %c0_10] : memref<8x128xf32, #tpu.memory_space<vmem>>, vector<8x128xf32>
    tpu.vector_store %arg7[%c0_9, %c0_10], %24 {strides = array<i32>} : memref<8x128xf32, #tpu.memory_space<vmem>>, vector<8x128xf32>,
    %c0_11 = arith.constant 0 : index
    %c0_12 = arith.constant 0 : index
    %26 = vector.load %arg5[%c0_11, %c0_12] : memref<8x128xf32, #tpu.memory_space<vmem>>, vector<8x128xf32>
    %27 = arith.addf %26, %22 : vector<8x128xf32>
    %c0_13 = arith.constant 0 : index
    %c0_14 = arith.constant 0 : index
    %28 = vector.load %arg5[%c0_13, %c0_14] : memref<8x128xf32, #tpu.memory_space<vmem>>, vector<8x128xf32>
    tpu.vector_store %arg5[%c0_13, %c0_14], %27 {strides = array<i32>} : memref<8x128xf32, #tpu.memory_space<vmem>>, vector<8x128xf32>,
    %c0_15 = arith.constant 0 : index
    %c0_16 = arith.constant 0 : index
    %29 = vector.load %arg6[%c0_15, %c0_16] : memref<8x128xf32, #tpu.memory_space<vmem>>, vector<8x128xf32>
    %30 = arith.mulf %8, %22 : vector<8x128xf32>
    %31 = arith.addf %29, %30 : vector<8x128xf32>
    %c0_17 = arith.constant 0 : index
    %c0_18 = arith.constant 0 : index
    %32 = vector.load %arg6[%c0_17, %c0_18] : memref<8x128xf32, #tpu.memory_space<vmem>>, vector<8x128xf32>
    tpu.vector_store %arg6[%c0_17, %c0_18], %31 {strides = array<i32>} : memref<8x128xf32, #tpu.memory_space<vmem>>, vector<8x128xf32>,
    %c0_i32_19 = arith.constant 0 : i32
    %33 = arith.cmpi eq, %arg1, %c0_i32_19 : i32
    %34 = arith.extui %33 : i1 to i32
    %c0_i32_20 = arith.constant 0 : i32
    %35 = arith.cmpi ne, %34, %c0_i32_20 : i32
    scf.if %35 {
      %c0_21 = arith.constant 0 : index
      %c0_22 = arith.constant 0 : index
      %36 = vector.load %arg7[%c0_21, %c0_22] : memref<8x128xf32, #tpu.memory_space<vmem>>, vector<8x128xf32>
      %37 = vector.shape_cast %36 : vector<8x128xf32> to vector<1x8x128xf32>
      %cst_23 = arith.constant dense<0.000000e+00> : vector<1xf32>
      %38 = vector.multi_reduction <add>, %37, %cst_23 [1, 2] : vector<1x8x128xf32> to vector<1xf32>
      %39 = vector.shape_cast %38 : vector<1xf32> to vector<1x1x1xf32>
      %40 = vector.extract %39[0, 0, 0] : f32 from vector<1x1x1xf32>
      %c0_24 = arith.constant 0 : index
      %c0_25 = arith.constant 0 : index
      %41 = memref.load %arg4[%c0_24, %c0_25] : memref<1x3xf32, #tpu.memory_space<smem>>
      memref.store %40, %arg4[%c0_24, %c0_25] : memref<1x3xf32, #tpu.memory_space<smem>>
      %c0_26 = arith.constant 0 : index
      %c0_27 = arith.constant 0 : index
      %42 = vector.load %arg5[%c0_26, %c0_27] : memref<8x128xf32, #tpu.memory_space<vmem>>, vector<8x128xf32>
      %43 = vector.shape_cast %42 : vector<8x128xf32> to vector<1x8x128xf32>
      %cst_28 = arith.constant dense<0.000000e+00> : vector<1xf32>
      %44 = vector.multi_reduction <add>, %43, %cst_28 [1, 2] : vector<1x8x128xf32> to vector<1xf32>
      %45 = vector.shape_cast %44 : vector<1xf32> to vector<1x1x1xf32>
      %46 = vector.extract %45[0, 0, 0] : f32 from vector<1x1x1xf32>
      %c0_29 = arith.constant 0 : index
      %c1 = arith.constant 1 : index
      %47 = memref.load %arg4[%c0_29, %c1] : memref<1x3xf32, #tpu.memory_space<smem>>
      memref.store %46, %arg4[%c0_29, %c1] : memref<1x3xf32, #tpu.memory_space<smem>>
      %c0_30 = arith.constant 0 : index
      %c0_31 = arith.constant 0 : index
      %48 = vector.load %arg6[%c0_30, %c0_31] : memref<8x128xf32, #tpu.memory_space<vmem>>, vector<8x128xf32>
      %49 = vector.shape_cast %48 : vector<8x128xf32> to vector<1x8x128xf32>
      %cst_32 = arith.constant dense<0.000000e+00> : vector<1xf32>
      %50 = vector.multi_reduction <add>, %49, %cst_32 [1, 2] : vector<1x8x128xf32> to vector<1xf32>
      %51 = vector.shape_cast %50 : vector<1xf32> to vector<1x1x1xf32>
      %52 = vector.extract %51[0, 0, 0] : f32 from vector<1x1x1xf32>
      %c0_33 = arith.constant 0 : index
      %c2 = arith.constant 2 : index
      %53 = memref.load %arg4[%c0_33, %c2] : memref<1x3xf32, #tpu.memory_space<smem>>
      memref.store %52, %arg4[%c0_33, %c2] : memref<1x3xf32, #tpu.memory_space<smem>>
    } else {
    }
    return
  }
  func.func @transform_0(%arg0: i32, %arg1: i32) -> (i32, i32) {
    %c1_i32 = arith.constant 1 : i32
    %0 = arith.muli %arg0, %c1_i32 : i32
    %1 = arith.addi %0, %arg1 : i32
    %c0_i32 = arith.constant 0 : i32
    %2 = arith.minsi %1, %c0_i32 : i32
    %c0_i32_0 = arith.constant 0 : i32
    %c0_i32_1 = arith.constant 0 : i32
    return %2, %c0_i32_0 : i32, i32
  }
  func.func @transform_1(%arg0: i32, %arg1: i32) -> (i32, i32) {
    %c1_i32 = arith.constant 1 : i32
    %0 = arith.muli %arg0, %c1_i32 : i32
    %1 = arith.addi %0, %arg1 : i32
    %c0_i32 = arith.constant 0 : i32
    %2 = arith.minsi %1, %c0_i32 : i32
    %c0_i32_0 = arith.constant 0 : i32
    %c0_i32_1 = arith.constant 0 : i32
    return %2, %c0_i32_0 : i32, i32
  }
  func.func @transform_2(%arg0: i32, %arg1: i32) -> (i32, i32) {
    %c0_i32 = arith.constant 0 : i32
    %c0_i32_0 = arith.constant 0 : i32
    return %arg0, %c0_i32 : i32, i32
  }
}

</mosaic_0001>

<llo_original>
// kernel: tpu_custom_call.1
$region0: #{tpu_custom_call.1}
  #allocation0 [shape = 'u32[]', space=smem, size = 0x4, offset = 0x4, fixed_abs, tag = 'smem constant byte address 0x4 - core index']
  #allocation1 [shape = 'u32[144,128]{1,0:T(1,128)}', space=vmem, size = 0x12000, scoped, tag = 'internal scratch']
  #allocation2 [shape = 'f32[8,128]{1,0:T(8,128)}', space=vmem, size = 0x1000, scoped, tag = 'scratch operand']
  #allocation3 [shape = 'f32[8,128]{1,0:T(8,128)}', space=vmem, size = 0x1000, scoped, tag = 'scratch operand']
  #allocation4 [shape = 'f32[8,128]{1,0:T(8,128)}', space=vmem, size = 0x1000, scoped, tag = 'scratch operand']
  %s0 = inlined_call_operand.hbm [shape: f32[8,128], index: 0, kind: input, shape index: {}]
  %s1 = inlined_call_operand.hbm [shape: f32[8,128], index: 1, kind: input, shape index: {}]
  %s2 = inlined_call_operand.hbm [shape: f32[1,3], index: 2, kind: output, shape index: {}]
  %s3 = sld [smem:[#allocation0]]
  $region34: #{tpu_custom_call.1} parent=0
    _
  %s5 = ssub.s32 1, %s3
  %s6 = scalar_select 0, %s5, %s3
  $region1: #{tpu_custom_call.1} parent=0
    #allocation5 [shape = 'u8[4096]{0}', space=vmem, size = 0x1000, scoped, tag = 'input window, operand 0, single buffered']
    #allocation6 [shape = 's32[1]{0}', space=sflag, size = 0x4, scoped, tag = 'scoped memory for tpu_custom_call.1']
    #allocation7 [shape = 's32[1]{0}', space=sflag, size = 0x4, scoped, tag = 'scoped memory for tpu_custom_call.1']
    #allocation8 [shape = 'u8[4096]{0}', space=vmem, size = 0x1000, scoped, tag = 'input window, operand 1, single buffered']
    #allocation9 [shape = 's32[1]{0}', space=sflag, size = 0x4, scoped, tag = 'scoped memory for tpu_custom_call.1']
    #allocation10 [shape = 'u8[512]{0}', space=smem, size = 0x200, scoped, tag = 'output window, operand 0, single buffered']
    %7 = vsyncpa [#allocation6], 0
    %8 = vsyncpa [#allocation9], 0
    %9 = vsyncpa [#allocation7], 0
    // Predicated region
    $region2: #{tpu_custom_call.1} parent=1 // pred_check
      _
    $region3: #{tpu_custom_call.1} parent=1 // pred_check_branch
      %11 = sbr.rel (0) target = $region5
    $region4: #{tpu_custom_call.1} parent=1 // pred_region
      %s12 = sadd.s32 0, 0
      %p13 = scmp.lt.s32.totalorder %s12, 0
      %s14 = scalar_select %p13, %s12, 0
      %s16 = ssub.s32 128, 128
      %17 = vsyncadd [#allocation6], %s16
      %s18 = smul.addr %s14, 128
      %s19 = scalar_lea.hbm %s0, %s18
      %s21 = sshll.u32 [#allocation5], 4
      %s22 = int_to_ptr.vmem [resolvable:$true] %s21
      %24 = dma.hbm_to_vmem [thread:$0]  %s19, 128, %s22, [#allocation6]
    $region5: #{tpu_custom_call.1} parent=1 // pred_fallthru
      _
    // Predicated region
    $region6: #{tpu_custom_call.1} parent=1 // pred_check
      _
    $region7: #{tpu_custom_call.1} parent=1 // pred_check_branch
      %26 = sbr.rel (0) target = $region9
    $region8: #{tpu_custom_call.1} parent=1 // pred_region
      %s27 = sadd.s32 0, 0
      %p28 = scmp.lt.s32.totalorder %s27, 0
      %s29 = scalar_select %p28, %s27, 0
      %s31 = ssub.s32 128, 128
      %32 = vsyncadd [#allocation9], %s31
      %s33 = smul.addr %s29, 128
      %s34 = scalar_lea.hbm %s1, %s33
      %s36 = sshll.u32 [#allocation8], 4
      %s37 = int_to_ptr.vmem [resolvable:$true] %s36
      %39 = dma.hbm_to_vmem [thread:$0]  %s34, 128, %s37, [#allocation9]
    $region9: #{tpu_custom_call.1} parent=1 // pred_fallthru
      _
    // Predicated region
    $region10: #{tpu_custom_call.1} parent=1 // pred_check
      _
    $region11: #{tpu_custom_call.1} parent=1 // pred_check_branch
      %41 = sbr.rel (0) target = $region13
    $region12: #{tpu_custom_call.1} parent=1 // pred_region
      %42 = dma.done [#allocation6], 128
    $region13: #{tpu_custom_call.1} parent=1 // pred_fallthru
      _
    // Predicated region
    $region14: #{tpu_custom_call.1} parent=1 // pred_check
      _
    $region15: #{tpu_custom_call.1} parent=1 // pred_check_branch
      %44 = sbr.rel (0) target = $region17
    $region16: #{tpu_custom_call.1} parent=1 // pred_region
      %45 = dma.done [#allocation9], 128
    $region17: #{tpu_custom_call.1} parent=1 // pred_fallthru
      _
    %s46 = sadd.s32 0, 0
    %p47 = scmp.lt.s32.totalorder %s46, 0
    %s48 = scalar_select %p47, %s46, 0
    %s49 = sadd.s32 0, 0
    %p50 = scmp.lt.s32.totalorder %s49, 0
    %s51 = scalar_select %p50, %s49, 0
    %p52 = scmp.eq.s32.totalorder 0, 0
    // Predicated region
    $region18: #{tpu_custom_call.1} parent=1 // pred_check
      %p53 = pneg %p52
    $region19: #{tpu_custom_call.1} parent=1 // pred_check_branch
      %55 = sbr.rel (%p53) target = $region21
    $region20: #{tpu_custom_call.1} parent=1 // pred_region
      %56 = vst [vmem:[#allocation4] sm:$0xff] 0.0
      %57 = vst [vmem:[#allocation2] sm:$0xff] 0.0
      %58 = vst [vmem:[#allocation3] sm:$0xff] 0.0
    $region21: #{tpu_custom_call.1} parent=1 // pred_fallthru
      _
    %v59 = vld [vmem:[#allocation5] sm:$0xff]
    %v60 = vld [vmem:[#allocation8] sm:$0xff]
    %vm61 = vcmp.ge.f32.partialorder %v60, 0.5
    %v62 = vsel %vm61, 1, 0
    %v63 = vcvt.s32.f32 %v62
    %vm64 = vcmp.ge.f32.partialorder %v59, 0.0
    %v65 = vsel %vm64, 1, 0
    %v66 = vcvt.s32.f32 %v65
    %v67 = vsub.f32 %v63, %v66
    %v68 = vmul.f32 %v59, %v67
    %v69 = vand.u32 2147483647, %v59
    %v70 = vsub.f32 0.0, %v69
    %v71 = vmul.f32 %v70, 1.442695
    %v72 = vpow.pop %v71
    %v73 = vadd.f32 %v72, 1.0
    %v74 = vlog2.pop %v73
    %v75 = vmul.f32 %v74, 0.6931472
    %v76 = vsub.f32 %v68, %v75
    %v77 = vld [vmem:[#allocation4] sm:$0xff]
    %v78 = vadd.f32 %v77, %v63
    %79 = vst [vmem:[#allocation4] sm:$0xff] %v78
    %v80 = vld [vmem:[#allocation2] sm:$0xff]
    %v81 = vadd.f32 %v80, %v76
    %82 = vst [vmem:[#allocation2] sm:$0xff] %v81
    %v83 = vld [vmem:[#allocation3] sm:$0xff]
    %v84 = vmul.f32 %v63, %v76
    %v85 = vadd.f32 %v83, %v84
    %86 = vst [vmem:[#allocation3] sm:$0xff] %v85
    // Predicated region
    $region22: #{tpu_custom_call.1} parent=1 // pred_check
      %p87 = pneg %p52
    $region23: #{tpu_custom_call.1} parent=1 // pred_check_branch
      %89 = sbr.rel (%p87) target = $region25
    $region24: #{tpu_custom_call.1} parent=1 // pred_region
      %v90 = vld [vmem:[#allocation4] sm:$0xff]
      %91 = vadd.xlane.f32.xlu0 %v90
      %v92 = vpop.xlane.xlu0 %91
      %v93 = vrot.slane %v92, 4
      %v94 = vadd.f32 %v92, %v93
      %v95 = vrot.slane %v94, 2
      %v96 = vadd.f32 %v94, %v95
      %v97 = vrot.slane %v96, 1
      %v98 = vadd.f32 %v96, %v97
      %s99 = vtos %v98
      %s100 = scalar_lea.smem [#allocation10], 0
      %101 = sst [smem:[%s100]] %s99
      %v102 = vld [vmem:[#allocation2] sm:$0xff]
      %103 = vadd.xlane.f32.xlu0 %v102
      %v104 = vpop.xlane.xlu0 %103
      %v105 = vrot.slane %v104, 4
      %v106 = vadd.f32 %v104, %v105
      %v107 = vrot.slane %v106, 2
      %v108 = vadd.f32 %v106, %v107
      %v109 = vrot.slane %v108, 1
      %v110 = vadd.f32 %v108, %v109
      %s111 = vtos %v110
      %s112 = scalar_lea.smem [#allocation10], 1
      %113 = sst [smem:[%s112]] %s111
      %v114 = vld [vmem:[#allocation3] sm:$0xff]
      %115 = vadd.xlane.f32.xlu0 %v114
      %v116 = vpop.xlane.xlu0 %115
      %v117 = vrot.slane %v116, 4
      %v118 = vadd.f32 %v116, %v117
      %v119 = vrot.slane %v118, 2
      %v120 = vadd.f32 %v118, %v119
      %v121 = vrot.slane %v120, 1
      %v122 = vadd.f32 %v120, %v121
      %s123 = vtos %v122
      %s124 = scalar_lea.smem [#allocation10], 2
      %125 = sst [smem:[%s124]] %s123
    $region25: #{tpu_custom_call.1} parent=1 // pred_fallthru
      _
    // Predicated region
    $region26: #{tpu_custom_call.1} parent=1 // pred_check
      _
    $region27: #{tpu_custom_call.1} parent=1 // pred_check_branch
      %127 = sbr.rel (0) target = $region29
    $region28: #{tpu_custom_call.1} parent=1 // pred_region
      %s129 = ssub.s32 16, 16
      %130 = vsyncadd [#allocation7], %s129
      %133 = dma.smem_to_hbm [#allocation10], 16, %s2, [#allocation7]
    $region29: #{tpu_custom_call.1} parent=1 // pred_fallthru
      _
    // Predicated region
    $region30: #{tpu_custom_call.1} parent=1 // pred_check
      _
    $region31: #{tpu_custom_call.1} parent=1 // pred_check_branch
      %135 = sbr.rel (0) target = $region33
    $region32: #{tpu_custom_call.1} parent=1 // pred_region
      %136 = dma.done [#allocation7], 16
    $region33: #{tpu_custom_call.1} parent=1 // pred_fallthru
      _
    %137 = sfence
    %138 = vsyncpa [#allocation6], 1
    %139 = vsyncpa [#allocation9], 1
    %140 = vsyncpa [#allocation7], 1

</llo_original>
